<compile_context>
chip_gen: v6e
topology: v6e:2x2x1
jax: 0.10.0
libtpu: 0.0.40
codegen_flags: <defaults>
</compile_context>

<pallas_src>
import jax
import jax.numpy as jnp
from jax.experimental import pallas as pl
from jax.experimental.pallas import tpu as pltpu


def _gcn_kernel_agg_first(edges_ref, nodes_ref, w_ref, b_ref, out_ref):
    """Aggregate first: h = A@X + X ; y = relu(h @ W_t + b).  Used when in_dim <= out_p."""
    # edges_ref: (1, TM, N)  nodes_ref: (1, N, in_dim)  w_ref: (in_dim, out_p)
    # b_ref: (1, out_p)      out_ref: (1, TM, out_p)
    r = pl.program_id(1)
    tm = out_ref.shape[1]
    row0 = pl.multiple_of(r * tm, tm)

    x_full = nodes_ref[0]                                    # (N, in_dim)
    x_rows = nodes_ref[0, pl.ds(row0, tm), :].astype(jnp.float32)  # (TM, in_dim)

    # (A + I) X restricted to this row tile == A_rows @ X + X_rows
    h = jnp.dot(edges_ref[0], x_full, preferred_element_type=jnp.float32) + x_rows
    y = jnp.dot(h, w_ref[...], preferred_element_type=jnp.float32) + b_ref[...]
    out_ref[0] = jnp.maximum(y, 0.0).astype(out_ref.dtype)


def _gcn_kernel_proj_first(edges_ref, nodes_ref, w_ref, b_ref, out_ref, z_ref):
    """Project first: Z = X @ W_t ; y = relu(A@Z + Z + b).  Used when out_p < in_dim.

    Z is computed once per batch element (at the first row tile) and kept in a
    persistent VMEM scratch; the row-tile grid axis is marked "arbitrary" so the
    r == 0 initialization always precedes the later row tiles of the same batch.
    """
    r = pl.program_id(1)
    tm = out_ref.shape[1]

    @pl.when(r == 0)
    def _():
        z_ref[...] = jnp.dot(nodes_ref[0], w_ref[...],
                             preferred_element_type=jnp.float32)

    row0 = pl.multiple_of(r * tm, tm)
    z_rows = z_ref[pl.ds(row0, tm), :]                        # (TM, out_p)

    y = jnp.dot(edges_ref[0], z_ref[...], preferred_element_type=jnp.float32) \
        + z_rows + b_ref[...]
    out_ref[0] = jnp.maximum(y, 0.0).astype(out_ref.dtype)


def _pick_row_tile(n, budget_bytes=24 * 1024 * 1024):
    """Largest multiple-of-8 row tile (<=512) dividing N whose double-buffered
    edges block (2 * TM * N * 4 B) stays within a conservative VMEM budget."""
    for tm in (512, 256, 128, 64, 32, 16, 8):
        if n % tm == 0 and 2 * tm * n * 4 <= budget_bytes:
            return tm
    return n  # small / odd N: single full-height tile (still a legal full-dim block)


def gcn_layer(nodes, edges, weight, bias=None):
    """nodes: (B, N, in_dim), edges: (B, N, N),
    weight: (out_dim, in_dim) (PyTorch nn.Linear layout), bias: (out_dim,) or None."""
    B, N, in_dim = nodes.shape
    out_dim = weight.shape[0]

    # Lane-dense output / weight: pad out_dim up to a multiple of 128.
    out_p = ((out_dim + 127) // 128) * 128

    # Pre-transpose + zero-pad the weight once on the host side: (in_dim, out_p).
    w_t = jnp.zeros((in_dim, out_p), dtype=jnp.float32).at[:, :out_dim].set(
        weight.astype(jnp.float32).T)
    b2 = jnp.zeros((1, out_p), dtype=jnp.float32)
    if bias is not None:
        b2 = b2.at[0, :out_dim].set(bias.astype(jnp.float32))

    tm = _pick_row_tile(N)
    grid = (B, N // tm)

    # Contract the dominant N x N matmul against the narrower feature width.
    proj_first = out_p < in_dim
    if proj_first:
        kernel = _gcn_kernel_proj_first
        scratch_shapes = [pltpu.VMEM((N, out_p), jnp.float32)]
        # Row-tile axis must run in order per batch (scratch init at r == 0).
        dim_sem = ("parallel", "arbitrary")
        flops = 2 * B * N * in_dim * out_p + 2 * B * N * N * out_p
    else:
        kernel = _gcn_kernel_agg_first
        scratch_shapes = []
        dim_sem = ("parallel", "parallel")
        flops = 2 * B * N * N * in_dim + 2 * B * N * in_dim * out_p

    bytes_accessed = 4 * (B * N * N + B * N * in_dim + in_dim * out_p
                          + out_p + B * N * out_p)

    out_padded = pl.pallas_call(
        kernel,
        out_shape=jax.ShapeDtypeStruct((B, N, out_p), nodes.dtype),
        grid_spec=pltpu.PrefetchScalarGridSpec(
            num_scalar_prefetch=0,
            grid=grid,
            in_specs=[
                pl.BlockSpec((1, tm, N), lambda b, r: (b, r, 0)),       # edges row tile
                pl.BlockSpec((1, N, in_dim), lambda b, r: (b, 0, 0)),   # nodes (resident per b)
                pl.BlockSpec((in_dim, out_p), lambda b, r: (0, 0)),     # W.T padded (resident)
                pl.BlockSpec((1, out_p), lambda b, r: (0, 0)),          # bias padded (resident)
            ],
            out_specs=pl.BlockSpec((1, tm, out_p), lambda b, r: (b, r, 0)),
            scratch_shapes=scratch_shapes,
        ),
        compiler_params=pltpu.CompilerParams(
            dimension_semantics=dim_sem,
            vmem_limit_bytes=48 * 1024 * 1024,  # headroom, still under v7x's 64 MiB
        ),
        cost_estimate=pl.CostEstimate(
            flops=int(flops), transcendentals=0, bytes_accessed=int(bytes_accessed)),
    )(edges, nodes, w_t, b2)

    return out_padded[..., :out_dim]


if __name__ == "__main__":
    def _run_case(B, N, in_dim, out_dim, seed=0):
        key = jax.random.PRNGKey(seed)
        k_nodes, k_edges, k_w, k_b = jax.random.split(key, 4)

        nodes = jax.random.normal(k_nodes, (B, N, in_dim), dtype=jnp.float32)
        # symmetric-ish nonnegative adjacency, like a graph adjacency matrix
        adj = jax.random.uniform(k_edges, (B, N, N), dtype=jnp.float32)
        edges = 0.5 * (adj + jnp.swapaxes(adj, -1, -2))

        # Deterministic "nn.Linear(in_dim, out_dim)" parameters.
        bound = 1.0 / (in_dim ** 0.5)
        weight = jax.random.uniform(k_w, (out_dim, in_dim), minval=-bound,
                                    maxval=bound, dtype=jnp.float32)
        bias = jax.random.uniform(k_b, (out_dim,), minval=-bound, maxval=bound,
                                  dtype=jnp.float32)

        out = jax.block_until_ready(gcn_layer(nodes, edges, weight, bias))

        # Pure-JAX reference.
        l_norm = edges + jnp.eye(N, dtype=edges.dtype)[None]
        ref = jnp.maximum(
            jnp.einsum("bij,bjk->bik", l_norm, nodes) @ weight.T + bias, 0.0)
        assert out.shape == (B, N, out_dim)
        assert jnp.allclose(out, ref, atol=1e-4, rtol=1e-4), "mismatch vs reference"

    # PRNGKey(0), small shapes consistent with the module's forward.
    _run_case(B=2, N=8, in_dim=16, out_dim=32)            # aggregate-first path
    _run_case(B=2, N=8, in_dim=256, out_dim=32, seed=1)   # project-first path

    print("KERNEL_OK")
</pallas_src>

<mosaic_0001>
module attributes {stable_mosaic.version = 11 : i64} {
  func.func @_gcn_kernel_agg_first(%arg0: i32, %arg1: i32, %arg2: memref<1x8x8xf32, #tpu.memory_space<vmem>>, %arg3: memref<1x8x16xf32, #tpu.memory_space<vmem>>, %arg4: memref<16x128xf32, #tpu.memory_space<vmem>>, %arg5: memref<1x128xf32, #tpu.memory_space<vmem>>, %arg6: memref<1x8x128xf32, #tpu.memory_space<vmem>>) attributes {dimension_semantics = [#tpu.dimension_semantics<parallel>, #tpu.dimension_semantics<parallel>], iteration_bounds = array<i64: 2, 1>, scalar_prefetch = 0 : i64, scratch_operands = 0 : i64, tpu.core_type = #tpu.core_type<tc>, window_params = [{transform_indices = @transform_0, window_bounds = array<i64: 1, 8, 8>}, {transform_indices = @transform_1, window_bounds = array<i64: 1, 8, 16>}, {pipeline_mode = #tpu.pipeline_mode<synchronous>, transform_indices = @transform_2, window_bounds = array<i64: 16, 128>}, {pipeline_mode = #tpu.pipeline_mode<synchronous>, transform_indices = @transform_3, window_bounds = array<i64: 1, 128>}, {transform_indices = @transform_4, window_bounds = array<i64: 1, 8, 128>}]} {
    %c8_i32 = arith.constant 8 : i32
    %0 = arith.muli %arg1, %c8_i32 : i32
    %1 = tpu.assume_multiple %0, 8 : i32
    %c0 = arith.constant 0 : index
    %c0_0 = arith.constant 0 : index
    %c0_1 = arith.constant 0 : index
    %2 = vector.load %arg3[%c0, %c0_0, %c0_1] : memref<1x8x16xf32, #tpu.memory_space<vmem>>, vector<1x8x16xf32>
    %3 = vector.shape_cast %2 : vector<1x8x16xf32> to vector<8x16xf32>
    %c0_2 = arith.constant 0 : index
    %4 = arith.index_cast %1 : i32 to index
    %c0_3 = arith.constant 0 : index
    %5 = vector.load %arg3[%c0_2, %4, %c0_3] : memref<1x8x16xf32, #tpu.memory_space<vmem>>, vector<1x8x16xf32>
    %6 = vector.shape_cast %5 : vector<1x8x16xf32> to vector<8x16xf32>
    %c0_4 = arith.constant 0 : index
    %c0_5 = arith.constant 0 : index
    %c0_6 = arith.constant 0 : index
    %7 = vector.load %arg2[%c0_4, %c0_5, %c0_6] : memref<1x8x8xf32, #tpu.memory_space<vmem>>, vector<1x8x8xf32>
    %8 = vector.shape_cast %7 : vector<1x8x8xf32> to vector<8x8xf32>
    %cst = arith.constant dense<0.000000e+00> : vector<8x16xf32>
    %9 = tpu.matmul %8, %3, %cst {dimension_numbers = #tpu.dot_dimension_numbers<[1], [0], [0], [1], [0, 0, 1, 1], [], []>} : vector<8x8xf32>, vector<8x16xf32>, vector<8x16xf32> -> vector<8x16xf32>
    %10 = arith.addf %9, %6 : vector<8x16xf32>
    %c0_7 = arith.constant 0 : index
    %c0_8 = arith.constant 0 : index
    %11 = vector.load %arg4[%c0_7, %c0_8] : memref<16x128xf32, #tpu.memory_space<vmem>>, vector<16x128xf32>
    %cst_9 = arith.constant dense<0.000000e+00> : vector<8x128xf32>
    %12 = tpu.matmul %10, %11, %cst_9 {dimension_numbers = #tpu.dot_dimension_numbers<[1], [0], [0], [1], [0, 0, 1, 1], [], []>} : vector<8x16xf32>, vector<16x128xf32>, vector<8x128xf32> -> vector<8x128xf32>
    %c0_10 = arith.constant 0 : index
    %c0_11 = arith.constant 0 : index
    %13 = vector.load %arg5[%c0_10, %c0_11] : memref<1x128xf32, #tpu.memory_space<vmem>>, vector<1x128xf32>
    %14 = vector.broadcast %13 : vector<1x128xf32> to vector<8x128xf32>
    %15 = arith.addf %12, %14 : vector<8x128xf32>
    %cst_12 = arith.constant 0.000000e+00 : f32
    %16 = vector.broadcast %cst_12 : f32 to vector<8x128xf32>
    %17 = arith.maximumf %15, %16 : vector<8x128xf32>
    %c0_13 = arith.constant 0 : index
    %c0_14 = arith.constant 0 : index
    %c0_15 = arith.constant 0 : index
    %18 = vector.load %arg6[%c0_13, %c0_14, %c0_15] : memref<1x8x128xf32, #tpu.memory_space<vmem>>, vector<1x8x128xf32>
    %19 = vector.shape_cast %18 : vector<1x8x128xf32> to vector<8x128xf32>
    %20 = vector.shape_cast %17 : vector<8x128xf32> to vector<1x8x128xf32>
    tpu.vector_store %arg6[%c0_13, %c0_14, %c0_15], %20 {strides = array<i32>} : memref<1x8x128xf32, #tpu.memory_space<vmem>>, vector<1x8x128xf32>,
    return
  }
  func.func @transform_0(%arg0: i32, %arg1: i32) -> (i32, i32, i32) {
    %c0_i32 = arith.constant 0 : i32
    %c0_i32_0 = arith.constant 0 : i32
    return %arg0, %arg1, %c0_i32 : i32, i32, i32
  }
  func.func @transform_1(%arg0: i32, %arg1: i32) -> (i32, i32, i32) {
    %c0_i32 = arith.constant 0 : i32
    %c0_i32_0 = arith.constant 0 : i32
    %c0_i32_1 = arith.constant 0 : i32
    return %arg0, %c0_i32, %c0_i32_0 : i32, i32, i32
  }
  func.func @transform_2(%arg0: i32, %arg1: i32) -> (i32, i32) {
    %c0_i32 = arith.constant 0 : i32
    %c0_i32_0 = arith.constant 0 : i32
    %c0_i32_1 = arith.constant 0 : i32
    return %c0_i32, %c0_i32_0 : i32, i32
  }
  func.func @transform_3(%arg0: i32, %arg1: i32) -> (i32, i32) {
    %c0_i32 = arith.constant 0 : i32
    %c0_i32_0 = arith.constant 0 : i32
    %c0_i32_1 = arith.constant 0 : i32
    return %c0_i32, %c0_i32_0 : i32, i32
  }
  func.func @transform_4(%arg0: i32, %arg1: i32) -> (i32, i32, i32) {
    %c0_i32 = arith.constant 0 : i32
    %c0_i32_0 = arith.constant 0 : i32
    return %arg0, %arg1, %c0_i32 : i32, i32, i32
  }
}

</mosaic_0001>

<llo_original>
// kernel: tpu_custom_call.1
$region0: #{tpu_custom_call.1}
  #allocation0 [shape = 'u32[]', space=smem, size = 0x4, offset = 0x4, fixed_abs, tag = 'smem constant byte address 0x4 - core index']
  #allocation1 [shape = 'u32[144,128]{1,0:T(1,128)}', space=vmem, size = 0x12000, scoped, tag = 'internal scratch']
  %s0 = inlined_call_operand.hbm [shape: f32[2,8,8], index: 0, kind: input, shape index: {}]
  %s1 = inlined_call_operand.hbm [shape: f32[2,8,16], index: 1, kind: input, shape index: {}]
  %s2 = inlined_call_operand.hbm [shape: f32[16,128], index: 2, kind: input, shape index: {}]
  %s3 = inlined_call_operand.vmem [shape: f32[1,128], index: 3, kind: input, shape index: {}]
  %s4 = inlined_call_operand.hbm [shape: f32[2,8,128], index: 4, kind: output, shape index: {}]
  %s5 = sld [smem:[#allocation0]]
  $region61: #{tpu_custom_call.1} parent=0
    _
  %s7 = ssub.s32 1, %s5
  %s8 = scalar_select 0, %s7, %s5
  $region1: #{tpu_custom_call.1} parent=0
    #allocation2 [shape = 'u8[8192]{0}', space=vmem, size = 0x2000, scoped, tag = 'input window, operand 0']
    #allocation3 [shape = 's32[2]{0}', space=sflag, size = 0x8, scoped, tag = 'scoped memory for tpu_custom_call.1']
    #allocation4 [shape = 's32[2]{0}', space=sflag, size = 0x8, scoped, tag = 'scoped memory for tpu_custom_call.1']
    #allocation5 [shape = 'u8[8192]{0}', space=vmem, size = 0x2000, scoped, tag = 'input window, operand 1']
    #allocation6 [shape = 's32[2]{0}', space=sflag, size = 0x8, scoped, tag = 'scoped memory for tpu_custom_call.1']
    #allocation7 [shape = 'u8[8192]{0}', space=vmem, size = 0x2000, scoped, tag = 'input window, operand 2, single buffered']
    #allocation8 [shape = 'u8[8192]{0}', space=vmem, size = 0x2000, scoped, tag = 'output window, operand 0']
    %9 = vsyncpa [#allocation3], 0
    %s10 = scalar_lea.sflag [#allocation3], 1
    %11 = vsyncpa %s10, 0
    %12 = vsyncpa [#allocation6], 0
    %s13 = scalar_lea.sflag [#allocation6], 1
    %14 = vsyncpa %s13, 0
    %15 = vsyncpa [#allocation4], 0
    %s16 = scalar_lea.sflag [#allocation4], 1
    %17 = vsyncpa %s16, 0
    loop: start=0, step=1, limit=4
    $region2: #{tpu_custom_call.1} parent=1 // loop_pre_header
      _
    $region3: #{tpu_custom_call.1} parent=1 // loop_header
      %s19 = sphi 0, %s23
      %p20 = scmp.ge.s32.totalorder %s19, 4
      %s26 = sphi 0, %s38
      %s27 = sphi 0, %s34
      %s28 = sphi 0, %s26
      %s29 = sphi 0, %s27
      %s30 = sphi 0, %s28
      %s31 = sphi 0, %s29
      %s43 = sphi 0, %s45
      %s46 = sphi 0, %s43
      %s47 = sphi 0, %s46
      %s63 = sphi 0, %s47
      %s69 = sphi 0, %s71
      %s72 = sphi 0, %s69
      %s73 = sphi 0, %s72
      %s89 = sphi 0, %s73
      %s93 = sphi 0, %s93
      %s95 = sphi 0, %s93
      %s96 = sphi 0, %s95
      %s110 = sphi 0, %s96
      %s114 = sphi 0, %s114
      %s116 = sphi 0, %s114
      %s117 = sphi 0, %s116
      %s131 = sphi 0, %s117
      %s139 = sphi 0, %s141
      %s142 = sphi 0, %s139
      %s143 = sphi 0, %s142
      %s159 = sphi 0, %s143
    $region4: #{tpu_custom_call.1} parent=1 // loop_header_branch
      %22 = sbr.rel (%p20) target = $region8
    $region5: #{tpu_custom_call.1} parent=1 // loop_body
      %s24 = ssub.s32 %s19, 1
      %s25 = ssub.s32 %s19, 2
      %s32 = sadd.s32 1, %s27
      %p33 = scmp.ge.s32.totalorder %s32, 1
      %s34 = scalar_select %p33, 0, %s32
      %s35 = sadd.s32 1, %s26
      %s36 = scalar_select %p33, %s35, %s26
      %p37 = scmp.ge.s32.totalorder %s36, 2
      %s38 = scalar_select %p37, 0, %s36
      %s39 = ssub.s32 %s26, %s38
      %s40 = ssub.s32 %s27, %s34
      %s41 = sor.u32 %s39, %s40
      %p42 = scmp.eq.s32.totalorder %s41, 0
      %s44 = sadd.s32 %s43, 1
      %s45 = scalar_select %p42, %s43, %s44
      %p48 = pneg %p42
      %p49 = scmp.eq.s32.totalorder %s19, 1
      %p50 = por %p48, %p49
      %p51 = scmp.ne.s32.totalorder %s43, %s46
      %p52 = scmp.eq.s32.totalorder %s19, 0
      %p53 = por %p51, %p52
      %p54 = scmp.ne.s32.totalorder %s43, %s46
      %p55 = scmp.eq.s32.totalorder %s24, 1
      %p56 = por %p54, %p55
      %p57 = scmp.ne.s32.totalorder %s46, %s47
      %p58 = scmp.eq.s32.totalorder %s24, 0
      %p59 = por %p57, %p58
      %p60 = scmp.ne.s32.totalorder %s46, %s47
      %p61 = scmp.eq.s32.totalorder %s25, 1
      %p62 = por %p60, %p61
      %p64 = scmp.ne.s32.totalorder %s47, %s63
      %p65 = scmp.eq.s32.totalorder %s25, 0
      %p66 = por %p64, %p65
      %s67 = ssub.s32 %s26, %s38
      %p68 = scmp.eq.s32.totalorder %s67, 0
      %s70 = sadd.s32 %s69, 1
      %s71 = scalar_select %p68, %s69, %s70
      %p74 = pneg %p68
      %p75 = scmp.eq.s32.totalorder %s19, 1
      %p76 = por %p74, %p75
      %p77 = scmp.ne.s32.totalorder %s69, %s72
      %p78 = scmp.eq.s32.totalorder %s19, 0
      %p79 = por %p77, %p78
      %p80 = scmp.ne.s32.totalorder %s69, %s72
      %p81 = scmp.eq.s32.totalorder %s24, 1
      %p82 = por %p80, %p81
      %p83 = scmp.ne.s32.totalorder %s72, %s73
      %p84 = scmp.eq.s32.totalorder %s24, 0
      %p85 = por %p83, %p84
      %p86 = scmp.ne.s32.totalorder %s72, %s73
      %p87 = scmp.eq.s32.totalorder %s25, 1
      %p88 = por %p86, %p87
      %p90 = scmp.ne.s32.totalorder %s73, %s89
      %p91 = scmp.eq.s32.totalorder %s25, 0
      %p92 = por %p90, %p91
      %s94 = sadd.s32 %s93, 1
      %p97 = scmp.eq.s32.totalorder %s19, 1
      %p98 = scmp.ne.s32.totalorder %s93, %s95
      %p99 = scmp.eq.s32.totalorder %s19, 0
      %p100 = por %p98, %p99
      %p101 = scmp.ne.s32.totalorder %s93, %s95
      %p102 = scmp.eq.s32.totalorder %s24, 1
      %p103 = por %p101, %p102
      %p104 = scmp.ne.s32.totalorder %s95, %s96
      %p105 = scmp.eq.s32.totalorder %s24, 0
      %p106 = por %p104, %p105
      %p107 = scmp.ne.s32.totalorder %s95, %s96
      %p108 = scmp.eq.s32.totalorder %s25, 1
      %p109 = por %p107, %p108
      %p111 = scmp.ne.s32.totalorder %s96, %s110
      %p112 = scmp.eq.s32.totalorder %s25, 0
      %p113 = por %p111, %p112
      %s115 = sadd.s32 %s114, 1
      %p118 = scmp.eq.s32.totalorder %s19, 1
      %p119 = scmp.ne.s32.totalorder %s114, %s116
      %p120 = scmp.eq.s32.totalorder %s19, 0
      %p121 = por %p119, %p120
      %p122 = scmp.ne.s32.totalorder %s114, %s116
      %p123 = scmp.eq.s32.totalorder %s24, 1
      %p124 = por %p122, %p123
      %p125 = scmp.ne.s32.totalorder %s116, %s117
      %p126 = scmp.eq.s32.totalorder %s24, 0
      %p127 = por %p125, %p126
      %p128 = scmp.ne.s32.totalorder %s116, %s117
      %p129 = scmp.eq.s32.totalorder %s25, 1
      %p130 = por %p128, %p129
      %p132 = scmp.ne.s32.totalorder %s117, %s131
      %p133 = scmp.eq.s32.totalorder %s25, 0
      %p134 = por %p132, %p133
      %s135 = ssub.s32 %s26, %s38
      %s136 = ssub.s32 %s27, %s34
      %s137 = sor.u32 %s135, %s136
      %p138 = scmp.eq.s32.totalorder %s137, 0
      %s140 = sadd.s32 %s139, 1
      %s141 = scalar_select %p138, %s139, %s140
      %p144 = pneg %p138
      %p145 = scmp.eq.s32.totalorder %s19, 1
      %p146 = por %p144, %p145
      %p147 = scmp.ne.s32.totalorder %s139, %s142
      %p148 = scmp.eq.s32.totalorder %s19, 0
      %p149 = por %p147, %p148
      %p150 = scmp.ne.s32.totalorder %s139, %s142
      %p151 = scmp.eq.s32.totalorder %s24, 1
      %p152 = por %p150, %p151
      %p153 = scmp.ne.s32.totalorder %s142, %s143
      %p154 = scmp.eq.s32.totalorder %s24, 0
      %p155 = por %p153, %p154
      %p156 = scmp.ne.s32.totalorder %s142, %s143
      %p157 = scmp.eq.s32.totalorder %s25, 1
      %p158 = por %p156, %p157
      %p160 = scmp.ne.s32.totalorder %s143, %s159
      %p161 = scmp.eq.s32.totalorder %s25, 0
      %p162 = por %p160, %p161
      %p163 = scmp.le.s32.totalorder 1, %s19
      %p164 = scmp.lt.s32.totalorder %s19, 3
      %p165 = pnand %p163, %p164
      %p166 = pneg %p165
      // Predicated region
      $region9: #{tpu_custom_call.1} parent=5 // pred_check
        _
      $region10: #{tpu_custom_call.1} parent=5 // pred_check_branch
        %168 = sbr.rel (%p165) target = $region12
      $region11: #{tpu_custom_call.1} parent=5 // pred_region
        %s169 = ssub.s32 %s19, 1
        // Predicated region
        $region13: #{tpu_custom_call.1} parent=11 // pred_check
          %p170 = pneg %p106
        $region14: #{tpu_custom_call.1} parent=11 // pred_check_branch
          %172 = sbr.rel (%p170) target = $region16
        $region15: #{tpu_custom_call.1} parent=11 // pred_region
          %s174 = ssub.s32 256, 256
          %175 = vsyncadd [#allocation6], %s174
          %s176 = sshll.u32 [#allocation7], 4
          %s177 = int_to_ptr.vmem [resolvable:$true] %s176
          %182 = dma.hbm_to_vmem [thread:$0]  %s2, 256, %s177, [#allocation6], 128, 128, 8
        $region16: #{tpu_custom_call.1} parent=11 // pred_fallthru
          _
        // Predicated region
        $region17: #{tpu_custom_call.1} parent=11 // pred_check
          %p183 = pneg %p127
        $region18: #{tpu_custom_call.1} parent=11 // pred_check_branch
          %185 = sbr.rel (%p183) target = $region20
        $region19: #{tpu_custom_call.1} parent=11 // pred_region
          _
        $region20: #{tpu_custom_call.1} parent=11 // pred_fallthru
          _
      $region12: #{tpu_custom_call.1} parent=5 // pred_fallthru
        _
      %p186 = scmp.lt.s32.totalorder %s19, 2
      // Predicated region
      $region21: #{tpu_custom_call.1} parent=5 // pred_check
        %p187 = pneg %p186
      $region22: #{tpu_custom_call.1} parent=5 // pred_check_branch
        %189 = sbr.rel (%p187) target = $region24
      $region23: #{tpu_custom_call.1} parent=5 // pred_region
        // Predicated region
        $region25: #{tpu_custom_call.1} parent=23 // pred_check
          %p190 = pneg %p53
        $region26: #{tpu_custom_call.1} parent=23 // pred_check_branch
          %192 = sbr.rel (%p190) target = $region28
        $region27: #{tpu_custom_call.1} parent=23 // pred_region
          %s193 = sand.u32 %s43, 1
          %s194 = scalar_lea.sflag [#allocation3], %s193
          %s195 = sand.u32 %s43, 1
          %s196 = smul.addr %s195, 8
          %s197 = scalar_lea.vmem [#allocation2], %s196
          %s199 = ssub.s32 128, 128
          %200 = vsyncadd %s194, %s199
          %s201 = sadd.s32 %s27, %s26
          %s202 = smul.addr %s201, 128
          %s203 = scalar_lea.hbm %s0, %s202
          %s205 = sshll.u32 %s197, 4
          %s206 = int_to_ptr.vmem [resolvable:$true] %s205
          %208 = dma.hbm_to_vmem [thread:$0]  %s203, 128, %s206, %s194
        $region28: #{tpu_custom_call.1} parent=23 // pred_fallthru
          _
        // Predicated region
        $region29: #{tpu_custom_call.1} parent=23 // pred_check
          %p209 = pneg %p79
        $region30: #{tpu_custom_call.1} parent=23 // pred_check_branch
          %211 = sbr.rel (%p209) target = $region32
        $region31: #{tpu_custom_call.1} parent=23 // pred_region
          %s212 = sand.u32 %s19, 1
          %s213 = scalar_lea.sflag [#allocation6], %s212
          %s214 = sand.u32 %s69, 1
          %s215 = smul.addr %s214, 8
          %s216 = scalar_lea.vmem [#allocation5], %s215
          %s218 = ssub.s32 128, 128
          %219 = vsyncadd %s213, %s218
          %s220 = smul.addr %s26, 128
          %s221 = scalar_lea.hbm %s1, %s220
          %s223 = sshll.u32 %s216, 4
          %s224 = int_to_ptr.vmem [resolvable:$true] %s223
          %226 = dma.hbm_to_vmem [thread:$0]  %s221, 128, %s224, %s213
        $region32: #{tpu_custom_call.1} parent=23 // pred_fallthru
          _
      $region24: #{tpu_custom_call.1} parent=5 // pred_fallthru
        _
      %p227 = scmp.le.s32.totalorder 1, %s19
      %p228 = scmp.lt.s32.totalorder %s19, 3
      %p229 = pnand %p227, %p228
      %p230 = pneg %p229
      // Predicated region
      $region33: #{tpu_custom_call.1} parent=5 // pred_check
        _
      $region34: #{tpu_custom_call.1} parent=5 // pred_check_branch
        %232 = sbr.rel (%p229) target = $region36
      $region35: #{tpu_custom_call.1} parent=5 // pred_region
        %s233 = ssub.s32 %s19, 1
        %s234 = sand.u32 %s46, 1
        %s235 = scalar_lea.sflag [#allocation3], %s234
        %s236 = sand.u32 %s46, 1
        %s237 = smul.addr %s236, 8
        %s238 = scalar_lea.vmem [#allocation2], %s237
        // Predicated region
        $region37: #{tpu_custom_call.1} parent=35 // pred_check
          %p239 = pneg %p59
        $region38: #{tpu_custom_call.1} parent=35 // pred_check_branch
          %241 = sbr.rel (%p239) target = $region40
        $region39: #{tpu_custom_call.1} parent=35 // pred_region
          %242 = dma.done %s235, 128
        $region40: #{tpu_custom_call.1} parent=35 // pred_fallthru
          _
        %s243 = sand.u32 %s24, 1
        %s244 = scalar_lea.sflag [#allocation6], %s243
        %s245 = sand.u32 %s72, 1
        %s246 = smul.addr %s245, 8
        %s247 = scalar_lea.vmem [#allocation5], %s246
        // Predicated region
        $region41: #{tpu_custom_call.1} parent=35 // pred_check
          %p248 = pneg %p85
        $region42: #{tpu_custom_call.1} parent=35 // pred_check_branch
          %250 = sbr.rel (%p248) target = $region44
        $region43: #{tpu_custom_call.1} parent=35 // pred_region
          %251 = dma.done %s244, 128
        $region44: #{tpu_custom_call.1} parent=35 // pred_fallthru
          _
        // Predicated region
        $region45: #{tpu_custom_call.1} parent=35 // pred_check
          %p252 = pneg %p106
        $region46: #{tpu_custom_call.1} parent=35 // pred_check_branch
          %254 = sbr.rel (%p252) target = $region48
        $region47: #{tpu_custom_call.1} parent=35 // pred_region
          %255 = dma.done [#allocation6], 256
        $region48: #{tpu_custom_call.1} parent=35 // pred_fallthru
          _
        %s256 = sand.u32 %s46, 1
        %s257 = scalar_lea.sflag [#allocation3], %s256
        %s258 = sand.u32 %s46, 1
        %s259 = smul.addr %s258, 8
        %s260 = scalar_lea.vmem [#allocation2], %s259
        %p261 = pneg %p59
        %p262 = pneg %p56
        %s263 = sand.u32 %s24, 1
        %s264 = scalar_lea.sflag [#allocation6], %s263
        %s265 = sand.u32 %s72, 1
        %s266 = smul.addr %s265, 8
        %s267 = scalar_lea.vmem [#allocation5], %s266
        %p268 = pneg %p85
        %p269 = pneg %p82
        %p270 = pneg %p106
        %p271 = pneg %p103
        %p272 = pneg %p127
        %p273 = pneg %p124
        %p274 = pneg %p155
        %p275 = pneg %p152
        %s276 = sand.u32 %s142, 1
        %s277 = scalar_lea.sflag [#allocation4], %s276
        %s278 = sand.u32 %s142, 1
        %s279 = smul.addr %s278, 8
        %s280 = scalar_lea.vmem [#allocation8], %s279
        %s281 = smul.u32 %s29, 8
        %v282 = vld [vmem:[%s247] sm:$0xff]
        %s283 = scalar_lea.vmem %s247, %s281 [#allocation5]
        %v284 = vld [vmem:[%s283] sm:$0xff]
        %v285 = vld [vmem:[%s238] sm:$0xff]
        %vm286 = vcmask 64512
        %v288 = vsel %vm286, %v285, 0
        %290 = vmatprep.subr.mxu0 0.0
        %291 = vmatpush1.msra.mxu0 0.0
        %292 = vmatprep.subr.mxu0 0.0
        %293 = vmatpush1.msra.mxu0 0.0
        %294 = vmatprep.subr.mxu0 0.0
        %295 = vmatpush1.msra.mxu0 0.0
        %296 = vmatprep.subr.mxu0 0.0
        %297 = vmatpush1.msra.mxu0 0.0
        %298 = vmatprep.subr.mxu0 0.0
        %299 = vmatpush1.msra.mxu0 0.0
        %300 = vmatprep.subr.mxu0 0.0
        %301 = vmatpush1.msra.mxu0 0.0
        %302 = vmatprep.subr.mxu0 0.0
        %303 = vmatpush1.msra.mxu0 0.0
        %304 = vmatprep.subr.mxu0 0.0
        %305 = vmatpush1.msra.mxu0 0.0
        %306 = vmatprep.subr.mxu0 0.0
        %307 = vmatpush1.msra.mxu0 0.0
        %308 = vmatprep.subr.mxu0 0.0
        %309 = vmatpush1.msra.mxu0 0.0
        %310 = vmatprep.subr.mxu0 0.0
        %311 = vmatpush1.msra.mxu0 0.0
        %312 = vmatprep.subr.mxu0 0.0
        %313 = vmatpush1.msra.mxu0 0.0
        %314 = vmatprep.subr.mxu0 0.0
        %315 = vmatpush1.msra.mxu0 0.0
        %316 = vmatprep.subr.mxu0 0.0
        %317 = vmatpush1.msra.mxu0 0.0
        %318 = vmatprep.subr.mxu0 0.0
        %319 = vmatpush1.msra.mxu0 0.0
        %320 = vmatprep.subr.mxu0 0.0
        %321 = vmatpush1.msra.mxu0 %v282
        %322 = vmatprep.subr.mxu0 0.0
        %323 = vmatpush2.msra.mxu0 0.0
        %324 = vmatprep.subr.mxu0 0.0
        %325 = vmatpush2.msra.mxu0 0.0
        %326 = vmatprep.subr.mxu0 0.0
        %327 = vmatpush2.msra.mxu0 0.0
        %328 = vmatprep.subr.mxu0 0.0
        %329 = vmatpush2.msra.mxu0 0.0
        %330 = vmatprep.subr.mxu0 0.0
        %331 = vmatpush2.msra.mxu0 0.0
        %332 = vmatprep.subr.mxu0 0.0
        %333 = vmatpush2.msra.mxu0 0.0
        %334 = vmatprep.subr.mxu0 0.0
        %335 = vmatpush2.msra.mxu0 0.0
        %336 = vmatprep.subr.mxu0 0.0
        %337 = vmatpush2.msra.mxu0 0.0
        %338 = vmatprep.subr.mxu0 0.0
        %339 = vmatpush2.msra.mxu0 0.0
        %340 = vmatprep.subr.mxu0 0.0
        %341 = vmatpush2.msra.mxu0 0.0
        %342 = vmatprep.subr.mxu0 0.0
        %343 = vmatpush2.msra.mxu0 0.0
        %344 = vmatprep.subr.mxu0 0.0
        %345 = vmatpush2.msra.mxu0 0.0
        %346 = vmatprep.subr.mxu0 0.0
        %347 = vmatpush2.msra.mxu0 0.0
        %348 = vmatprep.subr.mxu0 0.0
        %349 = vmatpush2.msra.mxu0 0.0
        %350 = vmatprep.subr.mxu0 0.0
        %351 = vmatpush2.msra.mxu0 0.0
        %352 = vmatprep.subr.mxu0 0.0
        %353 = vmatpush2.msra.mxu0 0.0
        %354 = vmatprep.mubr.f32.mxu0 0.0
        %355 = vmatmul.mubr.f32.gmra.mxu0 %v288
        %v356 = vpop.f32.mrf.mxu0
        %v357 = vadd.f32 %v284, %v356
        %v358 = vpop.f32.mrf.mxu0
        %359 = vdwg.mxu0
        %v360 = vld [vmem:[#allocation7] sm:$0xff]
        %v361 = vld [vmem:[#allocation7 + $0x8] sm:$0xff]
        %v362 = vld [vmem:[%s3] sm:$0x1]
        %v364 = vlaneseq
        %v365 = vshrl.u32 %v364, 7
        %v366 = vsub.s32 0, %v365
        %v367 = vrot.slane %v362, %v366
        %vm369 = vcmask 130048
        %v371 = vsel %vm369, %v357, 0
        %373 = vmatprep.subr.mxu0 0.0
        %374 = vmatpush1.msra.mxu0 0.0
        %375 = vmatprep.subr.mxu0 0.0
        %376 = vmatpush1.msra.mxu0 0.0
        %377 = vmatprep.subr.mxu0 0.0
        %378 = vmatpush1.msra.mxu0 0.0
        %379 = vmatprep.subr.mxu0 0.0
        %380 = vmatpush1.msra.mxu0 0.0
        %381 = vmatprep.subr.mxu0 0.0
        %382 = vmatpush1.msra.mxu0 0.0
        %383 = vmatprep.subr.mxu0 0.0
        %384 = vmatpush1.msra.mxu0 0.0
        %385 = vmatprep.subr.mxu0 0.0
        %386 = vmatpush1.msra.mxu0 0.0
        %387 = vmatprep.subr.mxu0 0.0
        %388 = vmatpush1.msra.mxu0 0.0
        %389 = vmatprep.subr.mxu0 0.0
        %390 = vmatpush1.msra.mxu0 0.0
        %391 = vmatprep.subr.mxu0 0.0
        %392 = vmatpush1.msra.mxu0 0.0
        %393 = vmatprep.subr.mxu0 0.0
        %394 = vmatpush1.msra.mxu0 0.0
        %395 = vmatprep.subr.mxu0 0.0
        %396 = vmatpush1.msra.mxu0 0.0
        %397 = vmatprep.subr.mxu0 0.0
        %398 = vmatpush1.msra.mxu0 0.0
        %399 = vmatprep.subr.mxu0 0.0
        %400 = vmatpush1.msra.mxu0 0.0
        %401 = vmatprep.subr.mxu0 0.0
        %402 = vmatpush1.msra.mxu0 %v361
        %403 = vmatprep.subr.mxu0 0.0
        %404 = vmatpush1.msra.mxu0 %v360
        %405 = vmatprep.subr.mxu0 0.0
        %406 = vmatpush2.msra.mxu0 0.0
        %407 = vmatprep.subr.mxu0 0.0
        %408 = vmatpush2.msra.mxu0 0.0
        %409 = vmatprep.subr.mxu0 0.0
        %410 = vmatpush2.msra.mxu0 0.0
        %411 = vmatprep.subr.mxu0 0.0
        %412 = vmatpush2.msra.mxu0 0.0
        %413 = vmatprep.subr.mxu0 0.0
        %414 = vmatpush2.msra.mxu0 0.0
        %415 = vmatprep.subr.mxu0 0.0
        %416 = vmatpush2.msra.mxu0 0.0
        %417 = vmatprep.subr.mxu0 0.0
        %418 = vmatpush2.msra.mxu0 0.0
        %419 = vmatprep.subr.mxu0 0.0
        %420 = vmatpush2.msra.mxu0 0.0
        %421 = vmatprep.subr.mxu0 0.0
        %422 = vmatpush2.msra.mxu0 0.0
        %423 = vmatprep.subr.mxu0 0.0
        %424 = vmatpush2.msra.mxu0 0.0
        %425 = vmatprep.subr.mxu0 0.0
        %426 = vmatpush2.msra.mxu0 0.0
        %427 = vmatprep.subr.mxu0 0.0
        %428 = vmatpush2.msra.mxu0 0.0
        %429 = vmatprep.subr.mxu0 0.0
        %430 = vmatpush2.msra.mxu0 0.0
        %431 = vmatprep.subr.mxu0 0.0
        %432 = vmatpush2.msra.mxu0 0.0
        %433 = vmatprep.subr.mxu0 0.0
        %434 = vmatpush2.msra.mxu0 0.0
        %435 = vmatprep.subr.mxu0 0.0
        %436 = vmatpush2.msra.mxu0 0.0
        %437 = vmatprep.mubr.f32.mxu0 0.0
        %438 = vmatmul.mubr.f32.gmra.mxu0 %v371
        %v439 = vpop.f32.mrf.mxu0
        %v440 = vadd.f32 %v367, %v439
        %v441 = vpop.f32.mrf.mxu0
        %442 = vdwg.mxu0
        %v443 = vmax.f32 %v440, 0.0
        %444 = vst [vmem:[%s280] sm:$0xff] %v443
        %s445 = sand.u32 %s142, 1
        %s446 = scalar_lea.sflag [#allocation4], %s445
        %s447 = sand.u32 %s142, 1
        %s448 = smul.addr %s447, 8
        %s449 = scalar_lea.vmem [#allocation8], %s448
        // Predicated region
        $region49: #{tpu_custom_call.1} parent=35 // pred_check
          %p450 = pneg %p152
        $region50: #{tpu_custom_call.1} parent=35 // pred_check_branch
          %452 = sbr.rel (%p450) target = $region52
        $region51: #{tpu_custom_call.1} parent=35 // pred_region
          %s454 = ssub.s32 128, 128
          %455 = vsyncadd %s446, %s454
          %s456 = sadd.s32 %s29, %s28
          %s457 = smul.addr %s456, 128
          %s458 = scalar_lea.hbm %s4, %s457
          %s460 = sshll.u32 %s449, 4
          %s461 = int_to_ptr.vmem [resolvable:$true] %s460
          %463 = dma.vmem_to_hbm [thread:$0]  %s461, 128, %s458, %s446
        $region52: #{tpu_custom_call.1} parent=35 // pred_fallthru
          _
      $region36: #{tpu_custom_call.1} parent=5 // pred_fallthru
        _
      %p464 = scmp.le.s32.totalorder 2, %s19
      // Predicated region
      $region53: #{tpu_custom_call.1} parent=5 // pred_check
        %p465 = pneg %p464
      $region54: #{tpu_custom_call.1} parent=5 // pred_check_branch
        %467 = sbr.rel (%p465) target = $region56
      $region55: #{tpu_custom_call.1} parent=5 // pred_region
        %s468 = ssub.s32 %s19, 2
        // Predicated region
        $region57: #{tpu_custom_call.1} parent=55 // pred_check
          %p469 = pneg %p158
        $region58: #{tpu_custom_call.1} parent=55 // pred_check_branch
          %471 = sbr.rel (%p469) target = $region60
        $region59: #{tpu_custom_call.1} parent=55 // pred_region
          %s472 = sand.u32 %s143, 1
          %s473 = scalar_lea.sflag [#allocation4], %s472
          %s474 = sand.u32 %s143, 1
          %s475 = smul.addr %s474, 8
          %s476 = scalar_lea.vmem [#allocation8], %s475
          %477 = dma.done %s473, 128
        $region60: #{tpu_custom_call.1} parent=55 // pred_fallthru
          _
      $region56: #{tpu_custom_call.1} parent=5 // pred_fallthru
        _
    $region6: #{tpu_custom_call.1} parent=1 // loop_footer
      %s23 = sadd.s32 1, %s19
    $region7: #{tpu_custom_call.1} parent=1 // loop_footer_branch
      %18 = sbr.rel target = $region3
    $region8: #{tpu_custom_call.1} parent=1 // loop_exit
      _
    %478 = vsyncpa [#allocation3], 1
    %s479 = scalar_lea.sflag [#allocation3], 1
    %480 = vsyncpa %s479, 1
    %481 = vsyncpa [#allocation6], 1
    %s482 = scalar_lea.sflag [#allocation6], 1
    %483 = vsyncpa %s482, 1
    %484 = vsyncpa [#allocation4], 1
    %s485 = scalar_lea.sflag [#allocation4], 1
    %486 = vsyncpa %s485, 1

</llo_original>
